<compile_context>
chip_gen: v7x
topology: tpu7x:2x2x1
jax: 0.10.0
libtpu: 0.0.40
codegen_flags: <defaults>
</compile_context>

<pallas_src>
import math
import functools

import jax
import jax.numpy as jnp
from jax.experimental import pallas as pl
from jax.experimental.pallas import tpu as pltpu


def _token_embed_kernel(x3_ref, w_ref, b_ref, o_ref):
    # x3_ref: (TL, 3*c_in)         pre-folded taps [x[i-1] | x[i] | x[i+1]]
    # w_ref : (3*c_in, d_model_p)  folded tap-major weight [W_k0; W_k1; W_k2]
    # b_ref : (1, d_model_p)       f32 bias row
    # o_ref : (TL, d_model_p)      lane-dense output tile
    y = jnp.dot(x3_ref[...], w_ref[...], preferred_element_type=jnp.float32)
    o_ref[...] = (y + b_ref[...]).astype(o_ref.dtype)


def _pick_tile_len(seq_len, sub_mult, max_rows):
    """Largest TL <= max_rows that divides L and is a multiple of sub_mult.
    Falls back to the full extent L (a full-extent block is always legal)."""
    if seq_len <= max_rows:
        return seq_len
    tl = (min(max_rows, seq_len) // sub_mult) * sub_mult
    while tl >= sub_mult:
        if seq_len % tl == 0:
            return tl
        tl -= sub_mult
    return seq_len


def token_embedding(x_ncw, weight, bias, *, tile_len=None,
                    compute_dtype=jnp.bfloat16, out_dtype=jnp.float32,
                    max_tile=2048, vmem_budget_bytes=12 << 20):
    """x_ncw: [B, c_in, L] (PyTorch Conv1d layout). Returns [B, L, d_model]."""
    B, c_in, L = x_ncw.shape
    d_model = weight.shape[0]

    # Lane-dense output: pad d_model to a multiple of 128 (unmasked vst),
    # slice the padding off after the kernel.
    d_model_pad = 128 * pl.cdiv(d_model, 128)

    in_bytes = jnp.dtype(compute_dtype).itemsize
    out_bytes = jnp.dtype(out_dtype).itemsize
    # Sublane tile: 8 rows for 32-bit, 16 for 16-bit (take the stricter of in/out).
    sub_mult = max(8 * 4 // in_bytes, 8 * 4 // out_bytes, 8)

    if tile_len is None:
        # Per-grid-step VMEM working set: double-buffered input + output tiles
        # plus the resident folded weight.  Budget keeps v5e (16 MiB default
        # scoped VMEM) safe while letting v6e/v7x reach 1-2K-row tiles.
        w_bytes = 3 * c_in * d_model_pad * in_bytes
        per_row = 2 * 3 * c_in * in_bytes + 2 * d_model_pad * out_bytes
        budget_rows = max((vmem_budget_bytes - w_bytes) // max(per_row, 1), sub_mult)
        max_rows = min(max_tile, budget_rows)
        if B == 1:
            # Keep >= 2 grid iterations on a parallel axis so both v7x TCs work.
            max_rows = min(max_rows, max(L // 2, sub_mult))
        tile_len = _pick_tile_len(L, sub_mult, max_rows)

    assert L % tile_len == 0, "tile_len must divide L"
    assert tile_len == L or tile_len % sub_mult == 0, (
        f"tile_len must be a multiple of {sub_mult} for these dtypes")
    num_t = L // tile_len

    # ---- XLA-side preprocessing (cheap relative to output traffic) ----------
    # Time-major input, cast once, then fold the 3 circular taps (im2col):
    #   tap 0 -> x[i-1], tap 1 -> x[i], tap 2 -> x[i+1]  (circular wrap via roll)
    x_t = jnp.transpose(x_ncw, (0, 2, 1)).astype(compute_dtype)        # [B, L, c_in]
    x3 = jnp.concatenate(
        [jnp.roll(x_t, 1, axis=1), x_t, jnp.roll(x_t, -1, axis=1)], axis=-1)  # [B,L,3c]

    # PyTorch Conv1d weight [d_model, c_in, 3] -> tap-major [3*c_in, d_model]
    w_folded = jnp.transpose(weight, (2, 1, 0)).reshape(3 * c_in, d_model)
    b_row = bias.reshape(1, d_model).astype(jnp.float32)               # f32 VPU add
    if d_model_pad != d_model:
        w_folded = jnp.pad(w_folded, ((0, 0), (0, d_model_pad - d_model)))
        b_row = jnp.pad(b_row, ((0, 0), (0, d_model_pad - d_model)))
    w_folded = w_folded.astype(compute_dtype)

    out = pl.pallas_call(
        _token_embed_kernel,
        out_shape=jax.ShapeDtypeStruct((B, L, d_model_pad), out_dtype),
        grid_spec=pltpu.PrefetchScalarGridSpec(
            num_scalar_prefetch=0,
            grid=(B, num_t),
            in_specs=[
                pl.BlockSpec((pl.Squeezed(), tile_len, 3 * c_in),
                             lambda b, t: (b, t, 0)),
                pl.BlockSpec((3 * c_in, d_model_pad), lambda b, t: (0, 0)),
                pl.BlockSpec((1, d_model_pad), lambda b, t: (0, 0)),
            ],
            out_specs=pl.BlockSpec((pl.Squeezed(), tile_len, d_model_pad),
                                   lambda b, t: (b, t, 0)),
        ),
        compiler_params=pltpu.CompilerParams(
            dimension_semantics=("parallel", "parallel"),
        ),
        # TODO(synk): if an xprof trace shows exposed output-write DMA, add
        # pipeline_mode=pl.Buffered(3) on out_specs.
    )(x3, w_folded, b_row)

    if d_model_pad != d_model:
        out = out[..., :d_model]
    return out


def _reference(x_ncw, weight, bias):
    """Pure-JAX f32 reference: circular-padded conv1d then transpose(1, 2)."""
    B, c_in, L = x_ncw.shape
    d_model = weight.shape[0]
    x_t = jnp.transpose(x_ncw, (0, 2, 1))
    x_pad = jnp.concatenate([x_t[:, -1:, :], x_t, x_t[:, :1, :]], axis=1)  # [B,L+2,c]
    out = jnp.zeros((B, L, d_model), jnp.float32)
    for k in range(3):
        out = out + jnp.einsum("blc,cd->bld",
                               x_pad[:, k:k + L, :], weight[:, :, k].T)
    return out + bias[None, None, :]


if __name__ == "__main__":
    B, c_in, L, d_model = 2, 4, 32, 32

    key = jax.random.PRNGKey(0)
    kx, kw, kb = jax.random.split(key, 3)

    # Input in PyTorch Conv1d layout [B, c_in, L]
    x = jax.random.normal(kx, (B, c_in, L), dtype=jnp.float32)

    # Kaiming-normal init, mode='fan_in', nonlinearity='leaky_relu' (slope 0.01)
    fan_in = c_in * 3
    gain = math.sqrt(2.0 / (1.0 + 0.01 ** 2))
    std = gain / math.sqrt(fan_in)
    weight = std * jax.random.normal(kw, (d_model, c_in, 3), dtype=jnp.float32)
    # PyTorch Conv1d default bias init: U(-1/sqrt(fan_in), 1/sqrt(fan_in))
    bound = 1.0 / math.sqrt(fan_in)
    bias = jax.random.uniform(kb, (d_model,), minval=-bound, maxval=bound,
                              dtype=jnp.float32)

    ref = _reference(x, weight, bias)

    # 1) f32 path, tight tolerance; tile_len=8 -> grid=(2, 4) exercises the
    #    L-tiling and the d_model-padding (32 -> 128) lane-dense store path.
    out_f32 = token_embedding(x, weight, bias, tile_len=8,
                              compute_dtype=jnp.float32)
    out_f32 = jax.block_until_ready(out_f32)
    assert out_f32.shape == (B, L, d_model)
    assert jnp.allclose(out_f32, ref, atol=1e-4, rtol=1e-4)

    # 2) Default bf16-input path (halved input DMA, f32 accumulation); looser
    #    tolerance reflects expected bf16 input precision, not a bug.
    out_bf16 = token_embedding(x, weight, bias, tile_len=16)
    out_bf16 = jax.block_until_ready(out_bf16)
    assert out_bf16.shape == (B, L, d_model)
    assert jnp.allclose(out_bf16, ref, atol=5e-2, rtol=5e-2)

    print("KERNEL_OK")
</pallas_src>

<mosaic_0001>
module attributes {stable_mosaic.version = 11 : i64} {
  func.func @_token_embed_kernel(%arg0: i32, %arg1: i32, %arg2: memref<1x8x12xf32, #tpu.memory_space<vmem>>, %arg3: memref<12x128xf32, #tpu.memory_space<vmem>>, %arg4: memref<1x128xf32, #tpu.memory_space<vmem>>, %arg5: memref<1x8x128xf32, #tpu.memory_space<vmem>>) attributes {dimension_semantics = [#tpu.dimension_semantics<parallel>, #tpu.dimension_semantics<parallel>], iteration_bounds = array<i64: 2, 4>, scalar_prefetch = 0 : i64, scratch_operands = 0 : i64, tpu.core_type = #tpu.core_type<tc>, window_params = [{transform_indices = @transform_0, window_bounds = array<i64: 1, 8, 12>}, {pipeline_mode = #tpu.pipeline_mode<synchronous>, transform_indices = @transform_1, window_bounds = array<i64: 12, 128>}, {pipeline_mode = #tpu.pipeline_mode<synchronous>, transform_indices = @transform_2, window_bounds = array<i64: 1, 128>}, {transform_indices = @transform_3, window_bounds = array<i64: 1, 8, 128>}]} {
    %c0 = arith.constant 0 : index
    %c0_0 = arith.constant 0 : index
    %c0_1 = arith.constant 0 : index
    %0 = vector.load %arg2[%c0, %c0_0, %c0_1] : memref<1x8x12xf32, #tpu.memory_space<vmem>>, vector<1x8x12xf32>
    %1 = vector.shape_cast %0 : vector<1x8x12xf32> to vector<8x12xf32>
    %c0_2 = arith.constant 0 : index
    %c0_3 = arith.constant 0 : index
    %2 = vector.load %arg3[%c0_2, %c0_3] : memref<12x128xf32, #tpu.memory_space<vmem>>, vector<12x128xf32>
    %cst = arith.constant dense<0.000000e+00> : vector<8x128xf32>
    %3 = tpu.matmul %1, %2, %cst {dimension_numbers = #tpu.dot_dimension_numbers<[1], [0], [0], [1], [0, 0, 1, 1], [], []>} : vector<8x12xf32>, vector<12x128xf32>, vector<8x128xf32> -> vector<8x128xf32>
    %c0_4 = arith.constant 0 : index
    %c0_5 = arith.constant 0 : index
    %4 = vector.load %arg4[%c0_4, %c0_5] : memref<1x128xf32, #tpu.memory_space<vmem>>, vector<1x128xf32>
    %5 = vector.broadcast %4 : vector<1x128xf32> to vector<8x128xf32>
    %6 = arith.addf %3, %5 : vector<8x128xf32>
    %c0_6 = arith.constant 0 : index
    %c0_7 = arith.constant 0 : index
    %c0_8 = arith.constant 0 : index
    %7 = vector.load %arg5[%c0_6, %c0_7, %c0_8] : memref<1x8x128xf32, #tpu.memory_space<vmem>>, vector<1x8x128xf32>
    %8 = vector.shape_cast %7 : vector<1x8x128xf32> to vector<8x128xf32>
    %9 = vector.shape_cast %6 : vector<8x128xf32> to vector<1x8x128xf32>
    tpu.vector_store %arg5[%c0_6, %c0_7, %c0_8], %9 {strides = array<i32>} : memref<1x8x128xf32, #tpu.memory_space<vmem>>, vector<1x8x128xf32>,
    return
  }
  func.func @transform_0(%arg0: i32, %arg1: i32) -> (i32, i32, i32) {
    %c0_i32 = arith.constant 0 : i32
    %c0_i32_0 = arith.constant 0 : i32
    return %arg0, %arg1, %c0_i32 : i32, i32, i32
  }
  func.func @transform_1(%arg0: i32, %arg1: i32) -> (i32, i32) {
    %c0_i32 = arith.constant 0 : i32
    %c0_i32_0 = arith.constant 0 : i32
    %c0_i32_1 = arith.constant 0 : i32
    return %c0_i32, %c0_i32_0 : i32, i32
  }
  func.func @transform_2(%arg0: i32, %arg1: i32) -> (i32, i32) {
    %c0_i32 = arith.constant 0 : i32
    %c0_i32_0 = arith.constant 0 : i32
    %c0_i32_1 = arith.constant 0 : i32
    return %c0_i32, %c0_i32_0 : i32, i32
  }
  func.func @transform_3(%arg0: i32, %arg1: i32) -> (i32, i32, i32) {
    %c0_i32 = arith.constant 0 : i32
    %c0_i32_0 = arith.constant 0 : i32
    return %arg0, %arg1, %c0_i32 : i32, i32, i32
  }
}

</mosaic_0001>

<llo_original>
// kernel: tpu_custom_call.1
$region0: #{tpu_custom_call.1}
  #allocation0 [shape = 'u32[]', space=smem, size = 0x4, offset = 0x4, fixed_abs, tag = 'smem constant byte address 0x4 - core index']
  #allocation1 [shape = 'u32[144,128]{1,0:T(1,128)}', space=vmem, size = 0x12000, scoped, tag = 'internal scratch']
  %s0 = inlined_call_operand.vmem [shape: f32[2,32,12], index: 0, kind: input, shape index: {}]
  %s1 = inlined_call_operand.vmem [shape: f32[12,128], index: 1, kind: input, shape index: {}]
  %s2 = inlined_call_operand.vmem [shape: f32[1,128], index: 2, kind: input, shape index: {}]
  %s3 = inlined_call_operand.hbm [shape: f32[2,32,128], index: 3, kind: output, shape index: {}]
  %s4 = sld [smem:[#allocation0]]
  $region45: #{tpu_custom_call.1} parent=0
    _
  %s6 = ssub.s32 1, %s4
  %s7 = scalar_select 0, %s6, %s4
  $region1: #{tpu_custom_call.1} parent=0
    #allocation2 [shape = 'u8[8192]{0}', space=vmem, size = 0x2000, scoped, tag = 'output window, operand 0']
    #allocation3 [shape = 's32[2]{0}', space=sflag, size = 0x8, scoped, tag = 'scoped memory for tpu_custom_call.1']
    %8 = vsyncpa [#allocation3], 0
    %s9 = scalar_lea.sflag [#allocation3], 1
    %10 = vsyncpa %s9, 0
    loop: start=0, step=1, limit=10
    $region2: #{tpu_custom_call.1} parent=1 // loop_pre_header
      _
    $region3: #{tpu_custom_call.1} parent=1 // loop_header
      %s12 = sphi 0, %s16
      %p13 = scmp.ge.s32.totalorder %s12, 10
      %s19 = sphi 0, %s31
      %s20 = sphi 0, %s27
      %s21 = sphi 0, %s19
      %s22 = sphi 0, %s20
      %s23 = sphi 0, %s21
      %s24 = sphi 0, %s22
      %s36 = sphi 0, %s38
      %s39 = sphi 0, %s36
      %s40 = sphi 0, %s39
      %s56 = sphi 0, %s40
      %s60 = sphi 0, %s60
      %s62 = sphi 0, %s60
      %s63 = sphi 0, %s62
      %s77 = sphi 0, %s63
      %s81 = sphi 0, %s81
      %s83 = sphi 0, %s81
      %s84 = sphi 0, %s83
      %s98 = sphi 0, %s84
      %s106 = sphi 0, %s108
      %s109 = sphi 0, %s106
      %s110 = sphi 0, %s109
      %s126 = sphi 0, %s110
    $region4: #{tpu_custom_call.1} parent=1 // loop_header_branch
      %15 = sbr.rel (%p13) target = $region8
    $region5: #{tpu_custom_call.1} parent=1 // loop_body
      %s17 = ssub.s32 %s12, 1
      %s18 = ssub.s32 %s12, 2
      %s25 = sadd.s32 1, %s20
      %p26 = scmp.ge.s32.totalorder %s25, 4
      %s27 = scalar_select %p26, 0, %s25
      %s28 = sadd.s32 1, %s19
      %s29 = scalar_select %p26, %s28, %s19
      %p30 = scmp.ge.s32.totalorder %s29, 2
      %s31 = scalar_select %p30, 0, %s29
      %s32 = ssub.s32 %s19, %s31
      %s33 = ssub.s32 %s20, %s27
      %s34 = sor.u32 %s32, %s33
      %p35 = scmp.eq.s32.totalorder %s34, 0
      %s37 = sadd.s32 %s36, 1
      %s38 = scalar_select %p35, %s36, %s37
      %p41 = pneg %p35
      %p42 = scmp.eq.s32.totalorder %s12, 7
      %p43 = por %p41, %p42
      %p44 = scmp.ne.s32.totalorder %s36, %s39
      %p45 = scmp.eq.s32.totalorder %s12, 0
      %p46 = por %p44, %p45
      %p47 = scmp.ne.s32.totalorder %s36, %s39
      %p48 = scmp.eq.s32.totalorder %s17, 7
      %p49 = por %p47, %p48
      %p50 = scmp.ne.s32.totalorder %s39, %s40
      %p51 = scmp.eq.s32.totalorder %s17, 0
      %p52 = por %p50, %p51
      %p53 = scmp.ne.s32.totalorder %s39, %s40
      %p54 = scmp.eq.s32.totalorder %s18, 7
      %p55 = por %p53, %p54
      %p57 = scmp.ne.s32.totalorder %s40, %s56
      %p58 = scmp.eq.s32.totalorder %s18, 0
      %p59 = por %p57, %p58
      %s61 = sadd.s32 %s60, 1
      %p64 = scmp.eq.s32.totalorder %s12, 7
      %p65 = scmp.ne.s32.totalorder %s60, %s62
      %p66 = scmp.eq.s32.totalorder %s12, 0
      %p67 = por %p65, %p66
      %p68 = scmp.ne.s32.totalorder %s60, %s62
      %p69 = scmp.eq.s32.totalorder %s17, 7
      %p70 = por %p68, %p69
      %p71 = scmp.ne.s32.totalorder %s62, %s63
      %p72 = scmp.eq.s32.totalorder %s17, 0
      %p73 = por %p71, %p72
      %p74 = scmp.ne.s32.totalorder %s62, %s63
      %p75 = scmp.eq.s32.totalorder %s18, 7
      %p76 = por %p74, %p75
      %p78 = scmp.ne.s32.totalorder %s63, %s77
      %p79 = scmp.eq.s32.totalorder %s18, 0
      %p80 = por %p78, %p79
      %s82 = sadd.s32 %s81, 1
      %p85 = scmp.eq.s32.totalorder %s12, 7
      %p86 = scmp.ne.s32.totalorder %s81, %s83
      %p87 = scmp.eq.s32.totalorder %s12, 0
      %p88 = por %p86, %p87
      %p89 = scmp.ne.s32.totalorder %s81, %s83
      %p90 = scmp.eq.s32.totalorder %s17, 7
      %p91 = por %p89, %p90
      %p92 = scmp.ne.s32.totalorder %s83, %s84
      %p93 = scmp.eq.s32.totalorder %s17, 0
      %p94 = por %p92, %p93
      %p95 = scmp.ne.s32.totalorder %s83, %s84
      %p96 = scmp.eq.s32.totalorder %s18, 7
      %p97 = por %p95, %p96
      %p99 = scmp.ne.s32.totalorder %s84, %s98
      %p100 = scmp.eq.s32.totalorder %s18, 0
      %p101 = por %p99, %p100
      %s102 = ssub.s32 %s19, %s31
      %s103 = ssub.s32 %s20, %s27
      %s104 = sor.u32 %s102, %s103
      %p105 = scmp.eq.s32.totalorder %s104, 0
      %s107 = sadd.s32 %s106, 1
      %s108 = scalar_select %p105, %s106, %s107
      %p111 = pneg %p105
      %p112 = scmp.eq.s32.totalorder %s12, 7
      %p113 = por %p111, %p112
      %p114 = scmp.ne.s32.totalorder %s106, %s109
      %p115 = scmp.eq.s32.totalorder %s12, 0
      %p116 = por %p114, %p115
      %p117 = scmp.ne.s32.totalorder %s106, %s109
      %p118 = scmp.eq.s32.totalorder %s17, 7
      %p119 = por %p117, %p118
      %p120 = scmp.ne.s32.totalorder %s109, %s110
      %p121 = scmp.eq.s32.totalorder %s17, 0
      %p122 = por %p120, %p121
      %p123 = scmp.ne.s32.totalorder %s109, %s110
      %p124 = scmp.eq.s32.totalorder %s18, 7
      %p125 = por %p123, %p124
      %p127 = scmp.ne.s32.totalorder %s110, %s126
      %p128 = scmp.eq.s32.totalorder %s18, 0
      %p129 = por %p127, %p128
      %p130 = scmp.le.s32.totalorder 1, %s12
      %p131 = scmp.lt.s32.totalorder %s12, 9
      %p132 = pnand %p130, %p131
      %p133 = pneg %p132
      // Predicated region
      $region9: #{tpu_custom_call.1} parent=5 // pred_check
        _
      $region10: #{tpu_custom_call.1} parent=5 // pred_check_branch
        %135 = sbr.rel (%p132) target = $region12
      $region11: #{tpu_custom_call.1} parent=5 // pred_region
        %s136 = ssub.s32 %s12, 1
        // Predicated region
        $region13: #{tpu_custom_call.1} parent=11 // pred_check
          %p137 = pneg %p73
        $region14: #{tpu_custom_call.1} parent=11 // pred_check_branch
          %139 = sbr.rel (%p137) target = $region16
        $region15: #{tpu_custom_call.1} parent=11 // pred_region
          _
        $region16: #{tpu_custom_call.1} parent=11 // pred_fallthru
          _
        // Predicated region
        $region17: #{tpu_custom_call.1} parent=11 // pred_check
          %p140 = pneg %p94
        $region18: #{tpu_custom_call.1} parent=11 // pred_check_branch
          %142 = sbr.rel (%p140) target = $region20
        $region19: #{tpu_custom_call.1} parent=11 // pred_region
          _
        $region20: #{tpu_custom_call.1} parent=11 // pred_fallthru
          _
      $region12: #{tpu_custom_call.1} parent=5 // pred_fallthru
        _
      %p143 = scmp.lt.s32.totalorder %s12, 8
      // Predicated region
      $region21: #{tpu_custom_call.1} parent=5 // pred_check
        %p144 = pneg %p143
      $region22: #{tpu_custom_call.1} parent=5 // pred_check_branch
        %146 = sbr.rel (%p144) target = $region24
      $region23: #{tpu_custom_call.1} parent=5 // pred_region
        // Predicated region
        $region25: #{tpu_custom_call.1} parent=23 // pred_check
          %p147 = pneg %p46
        $region26: #{tpu_custom_call.1} parent=23 // pred_check_branch
          %149 = sbr.rel (%p147) target = $region28
        $region27: #{tpu_custom_call.1} parent=23 // pred_region
          %p150 = scmp.lt.s32.totalorder %s19, 1
          %s151 = scalar_select %p150, %s19, 1
          %p152 = scmp.lt.s32.totalorder %s20, 3
          %s153 = scalar_select %p152, %s20, 3
          %s154 = smul.addr %s151, 4
          %s155 = sadd.s32 %s153, %s154
          %s156 = smul.addr %s155, 8
          %s157 = scalar_lea.vmem %s0, %s156
        $region28: #{tpu_custom_call.1} parent=23 // pred_fallthru
          _
      $region24: #{tpu_custom_call.1} parent=5 // pred_fallthru
        _
      %p158 = scmp.le.s32.totalorder 1, %s12
      %p159 = scmp.lt.s32.totalorder %s12, 9
      %p160 = pnand %p158, %p159
      %p161 = pneg %p160
      // Predicated region
      $region29: #{tpu_custom_call.1} parent=5 // pred_check
        _
      $region30: #{tpu_custom_call.1} parent=5 // pred_check_branch
        %163 = sbr.rel (%p160) target = $region32
      $region31: #{tpu_custom_call.1} parent=5 // pred_region
        %s164 = ssub.s32 %s12, 1
        %p165 = scmp.lt.s32.totalorder %s21, 1
        %s166 = scalar_select %p165, %s21, 1
        %p167 = scmp.lt.s32.totalorder %s22, 3
        %s168 = scalar_select %p167, %s22, 3
        %s169 = smul.addr %s166, 4
        %s170 = sadd.s32 %s168, %s169
        %s171 = smul.addr %s170, 8
        %s172 = scalar_lea.vmem %s0, %s171
        %p173 = pneg %p52
        %p174 = pneg %p49
        %p175 = pneg %p73
        %p176 = pneg %p70
        %p177 = pneg %p94
        %p178 = pneg %p91
        %p179 = pneg %p122
        %p180 = pneg %p119
        %s181 = sand.u32 %s109, 1
        %s182 = scalar_lea.sflag [#allocation3], %s181
        %s183 = sand.u32 %s109, 1
        %s184 = smul.addr %s183, 8
        %s185 = scalar_lea.vmem [#allocation2], %s184
        %p186 = scmp.lt.s32.totalorder %s21, 1
        %s187 = scalar_select %p186, %s21, 1
        %p188 = scmp.lt.s32.totalorder %s22, 3
        %s189 = scalar_select %p188, %s22, 3
        %s190 = smul.addr %s187, 4
        %s191 = sadd.s32 %s189, %s190
        %s192 = smul.addr %s191, 8
        %s193 = scalar_lea.vmem %s0, %s192
        %v194 = vld [vmem:[%s193] sm:$0xff]
        %v195 = vld [vmem:[%s1] sm:$0xff]
        %v196 = vld [vmem:[%s1 + $0x8] sm:$0xf]
        %v197 = vld [vmem:[%s2] sm:$0x1]
        %v199 = vlaneseq
        %v200 = vshrl.u32 %v199, 7
        %v201 = vsub.s32 0, %v200
        %v202 = vrot.slane %v197, %v201
        %vm204 = vcmask 97280
        %v206 = vsel %vm204, %v194, 0
        %vm208 = vcmask 1043456
        %v210 = vsel %vm208, %v196, 0
        %212 = vmatprep.subr.mxu0 0.0
        %213 = vmatpush1.msra.mxu0 %v195
        %214 = vmatprep.subr.mxu0 0.0
        %215 = vmatpush1.msra.mxu0 %v210
        %216 = vmatprep.subr.mxu0 0.0
        %217 = vmatpush1.msra.mxu0 0.0
        %218 = vmatprep.subr.mxu0 0.0
        %219 = vmatpush1.msra.mxu0 0.0
        %220 = vmatprep.subr.mxu0 0.0
        %221 = vmatpush1.msra.mxu0 0.0
        %222 = vmatprep.subr.mxu0 0.0
        %223 = vmatpush1.msra.mxu0 0.0
        %224 = vmatprep.subr.mxu0 0.0
        %225 = vmatpush1.msra.mxu0 0.0
        %226 = vmatprep.subr.mxu0 0.0
        %227 = vmatpush1.msra.mxu0 0.0
        %228 = vmatprep.subr.mxu0 0.0
        %229 = vmatpush1.msra.mxu0 0.0
        %230 = vmatprep.subr.mxu0 0.0
        %231 = vmatpush1.msra.mxu0 0.0
        %232 = vmatprep.subr.mxu0 0.0
        %233 = vmatpush1.msra.mxu0 0.0
        %234 = vmatprep.subr.mxu0 0.0
        %235 = vmatpush1.msra.mxu0 0.0
        %236 = vmatprep.subr.mxu0 0.0
        %237 = vmatpush1.msra.mxu0 0.0
        %238 = vmatprep.subr.mxu0 0.0
        %239 = vmatpush1.msra.mxu0 0.0
        %240 = vmatprep.subr.mxu0 0.0
        %241 = vmatpush1.msra.mxu0 0.0
        %242 = vmatprep.subr.mxu0 0.0
        %243 = vmatpush1.msra.mxu0 0.0
        %244 = vmatprep.subr.mxu0 0.0
        %245 = vmatpush1.msra.mxu0 0.0
        %246 = vmatprep.subr.mxu0 0.0
        %247 = vmatpush1.msra.mxu0 0.0
        %248 = vmatprep.subr.mxu0 0.0
        %249 = vmatpush1.msra.mxu0 0.0
        %250 = vmatprep.subr.mxu0 0.0
        %251 = vmatpush1.msra.mxu0 0.0
        %252 = vmatprep.subr.mxu0 0.0
        %253 = vmatpush1.msra.mxu0 0.0
        %254 = vmatprep.subr.mxu0 0.0
        %255 = vmatpush1.msra.mxu0 0.0
        %256 = vmatprep.subr.mxu0 0.0
        %257 = vmatpush1.msra.mxu0 0.0
        %258 = vmatprep.subr.mxu0 0.0
        %259 = vmatpush1.msra.mxu0 0.0
        %260 = vmatprep.subr.mxu0 0.0
        %261 = vmatpush1.msra.mxu0 0.0
        %262 = vmatprep.subr.mxu0 0.0
        %263 = vmatpush1.msra.mxu0 0.0
        %264 = vmatprep.subr.mxu0 0.0
        %265 = vmatpush1.msra.mxu0 0.0
        %266 = vmatprep.subr.mxu0 0.0
        %267 = vmatpush1.msra.mxu0 0.0
        %268 = vmatprep.subr.mxu0 0.0
        %269 = vmatpush1.msra.mxu0 0.0
        %270 = vmatprep.subr.mxu0 0.0
        %271 = vmatpush1.msra.mxu0 0.0
        %272 = vmatprep.subr.mxu0 0.0
        %273 = vmatpush1.msra.mxu0 0.0
        %274 = vmatprep.subr.mxu0 0.0
        %275 = vmatpush1.msra.mxu0 0.0
        %276 = vmatprep.mubr.f32.mxu0 0.0
        %277 = vmatmul.mubr.f32.gmra.mrb[0].mxu0 %v206
        %v278 = vpop.f32.mrb[0].mxu0
        %v279 = vadd.f32 %v202, %v278
        %v280 = vpop.f32.mrb[0].mxu0
        %281 = vdwg.mxu0
        %282 = vst [vmem:[%s185] sm:$0xff] %v279
        %s283 = sand.u32 %s109, 1
        %s284 = scalar_lea.sflag [#allocation3], %s283
        %s285 = sand.u32 %s109, 1
        %s286 = smul.addr %s285, 8
        %s287 = scalar_lea.vmem [#allocation2], %s286
        // Predicated region
        $region33: #{tpu_custom_call.1} parent=31 // pred_check
          %p288 = pneg %p119
        $region34: #{tpu_custom_call.1} parent=31 // pred_check_branch
          %290 = sbr.rel (%p288) target = $region36
        $region35: #{tpu_custom_call.1} parent=31 // pred_region
          %s292 = ssub.s32 128, 128
          %293 = vsyncadd %s284, %s292
          %s294 = smul.addr %s21, 4
          %s295 = sadd.s32 %s22, %s294
          %s296 = smul.addr %s295, 128
          %s297 = scalar_lea.hbm %s3, %s296
          %s299 = sshll.u32 %s287, 4
          %s300 = int_to_ptr.vmem [resolvable:$true] %s299
          %302 = dma.vmem_to_hbm [thread:$0]  %s300, 128, %s297, %s284
        $region36: #{tpu_custom_call.1} parent=31 // pred_fallthru
          _
      $region32: #{tpu_custom_call.1} parent=5 // pred_fallthru
        _
      %p303 = scmp.le.s32.totalorder 2, %s12
      // Predicated region
      $region37: #{tpu_custom_call.1} parent=5 // pred_check
        %p304 = pneg %p303
      $region38: #{tpu_custom_call.1} parent=5 // pred_check_branch
        %306 = sbr.rel (%p304) target = $region40
      $region39: #{tpu_custom_call.1} parent=5 // pred_region
        %s307 = ssub.s32 %s12, 2
        // Predicated region
        $region41: #{tpu_custom_call.1} parent=39 // pred_check
          %p308 = pneg %p125
        $region42: #{tpu_custom_call.1} parent=39 // pred_check_branch
          %310 = sbr.rel (%p308) target = $region44
        $region43: #{tpu_custom_call.1} parent=39 // pred_region
          %s311 = sand.u32 %s110, 1
          %s312 = scalar_lea.sflag [#allocation3], %s311
          %s313 = sand.u32 %s110, 1
          %s314 = smul.addr %s313, 8
          %s315 = scalar_lea.vmem [#allocation2], %s314
          %316 = dma.done %s312, 128
        $region44: #{tpu_custom_call.1} parent=39 // pred_fallthru
          _
      $region40: #{tpu_custom_call.1} parent=5 // pred_fallthru
        _
    $region6: #{tpu_custom_call.1} parent=1 // loop_footer
      %s16 = sadd.s32 1, %s12
    $region7: #{tpu_custom_call.1} parent=1 // loop_footer_branch
      %11 = sbr.rel target = $region3
    $region8: #{tpu_custom_call.1} parent=1 // loop_exit
      _
    %317 = vsyncpa [#allocation3], 1
    %s318 = scalar_lea.sflag [#allocation3], 1
    %319 = vsyncpa %s318, 1

</llo_original>
